<compile_context>
chip_gen: v7x
topology: tpu7x:2x2x1
jax: 0.10.0
libtpu: 0.0.40
codegen_flags: <defaults>
</compile_context>

<pallas_src>
import numpy as np
import jax
import jax.numpy as jnp
from jax.experimental import pallas as pl
from jax.experimental.pallas import tpu as pltpu

LANE = 128


def _round_up(n, m):
    return ((n + m - 1) // m) * m


def _pad2d(a, rows, cols):
    r, c = a.shape
    if r == rows and c == cols:
        return a
    return jnp.pad(a, ((0, rows - r), (0, cols - c)))


def beam_classifier_kernel(x_ref, cb_ref, w1_ref, b1_ref, w2_ref, b2_ref,
                           w3_ref, b3_ref, out_ref):
    """One batch tile: fused codebook matmul -> |.|^2 -> 3-layer ReLU MLP."""
    cdt = cb_ref.dtype                         # MXU input dtype (bf16 or f32)
    x = x_ref[...].astype(cdt)                 # cast in-kernel: free VPU op, no extra HBM pass

    # PhaseShifter: single fused matmul. Lanes [0, n_wide) hold the real part of the
    # beamformed signal, lanes [n_wide, 2*n_wide) the imag part, remaining lanes are 0.
    s = jnp.dot(x, cb_ref[...], preferred_element_type=jnp.float32)

    # ComputePower + relu: power = real^2 + imag^2 >= 0, so relu(bf_power) is identity.
    # The real/imag lane-sum is folded into dense1 (w1's rows are duplicated for the
    # imag lanes, zero elsewhere), so squaring alone is enough here — no cross-lane op.
    p = s * s

    h = jnp.dot(p.astype(cdt), w1_ref[...], preferred_element_type=jnp.float32)
    h = jnp.maximum(h + b1_ref[...], 0.0)                      # relu(dense1)

    h = jnp.dot(h.astype(cdt), w2_ref[...], preferred_element_type=jnp.float32)
    h = jnp.maximum(h + b2_ref[...], 0.0)                      # relu(dense2)

    out = jnp.dot(h.astype(cdt), w3_ref[...], preferred_element_type=jnp.float32)
    out_ref[...] = (out + b3_ref[...]).astype(out_ref.dtype)   # dense3 (logits)


def prepare_params(cb_real, cb_imag, w1, b1, w2, b2, w3, b3,
                   *, compute_dtype=jnp.bfloat16):
    """One-time padding/fusion/cast of the module parameters (tiny, done once)."""
    in_f, n_wide = cb_real.shape
    h1 = w1.shape[1]
    h2 = w2.shape[1]
    n_narrow = w3.shape[1]

    nw_p = _round_up(2 * n_wide, LANE)   # fused real|imag lane slab
    h1_p = _round_up(h1, LANE)
    h2_p = _round_up(h2, LANE)

    # Fused codebook: real-output columns in lanes [0, n_wide),
    # imag-output columns in lanes [n_wide, 2*n_wide), zeros elsewhere.
    cb = jnp.zeros((in_f, nw_p), jnp.float32)
    cb = cb.at[:, :n_wide].set(cb_real).at[:, n_wide:2 * n_wide].set(cb_imag)

    # dense1 with the power lane-sum folded in: rows [0, n_wide) and
    # [n_wide, 2*n_wide) both hold w1; padded rows/cols are zero, which keeps
    # the garbage/zero lanes of the squared signal out of the result.
    w1d = jnp.zeros((nw_p, h1_p), jnp.float32)
    w1d = w1d.at[:n_wide, :h1].set(w1).at[n_wide:2 * n_wide, :h1].set(w1)

    return dict(
        cb=cb.astype(compute_dtype),
        w1=w1d.astype(compute_dtype),
        b1=_pad2d(b1, 1, h1_p).astype(jnp.float32),
        w2=_pad2d(w2, h1_p, h2_p).astype(compute_dtype),
        b2=_pad2d(b2, 1, h2_p).astype(jnp.float32),
        w3=_pad2d(w3, h2_p, n_narrow).astype(compute_dtype),
        b3=jnp.reshape(b3, (1, n_narrow)).astype(jnp.float32),
    )


def beam_classifier_forward(x, params, *, tile_b=2048, vmem_limit_bytes=None):
    B, in_f = x.shape
    cb, w1, b1 = params["cb"], params["w1"], params["b1"]
    w2, b2 = params["w2"], params["b2"]
    w3, b3 = params["w3"], params["b3"]
    nw_p = cb.shape[1]
    h1_p = w1.shape[1]
    h2_p = w2.shape[1]
    n_narrow = w3.shape[1]

    # Batch tile: forced to a multiple of 8 (sublane rule); large by default to
    # amortize the ~0.35us per-grid-step overhead; capped so there are >= 2 grid
    # steps whenever B allows it, letting ("parallel",) shard across both
    # TensorCores on v7x. Ragged last tile is handled by Pallas masking (no pad).
    tb = max(8, (min(tile_b, _round_up(B, 8)) // 8) * 8)
    if B >= 16:
        tb = min(tb, _round_up(pl.cdiv(B, 2), 8))
    grid = (pl.cdiv(B, tb),)

    def stream(shape):
        return pl.BlockSpec(shape, lambda i: (i, 0))

    def resident(shape):
        return pl.BlockSpec(shape, lambda i: (0, 0))

    return pl.pallas_call(
        beam_classifier_kernel,
        out_shape=jax.ShapeDtypeStruct((B, n_narrow), jnp.float32),
        grid=grid,
        in_specs=[
            stream((tb, in_f)),                 # x tile (streamed, pipelined)
            resident((in_f, nw_p)),             # fused codebook (VMEM-resident)
            resident((nw_p, h1_p)), resident((1, h1_p)),      # dense1 (+ power fold)
            resident((h1_p, h2_p)), resident((1, h2_p)),      # dense2
            resident((h2_p, n_narrow)), resident((1, n_narrow)),  # dense3
        ],
        out_specs=stream((tb, n_narrow)),       # only the valid logits are written
        compiler_params=pltpu.CompilerParams(
            dimension_semantics=("parallel",),  # batch grid shards over TCs (v7x)
            vmem_limit_bytes=vmem_limit_bytes,  # raise only if tile_b pushed past ~4-8K
        ),
    )(x, cb, w1, b1, w2, b2, w3, b3)


def build_params(key, n_antenna, n_wide_beam, n_narrow_beam):
    """Deterministic synthetic parameters matching Beam_Classifier.__init__ shapes."""
    k_theta, k1, kb1, k2, kb2, k3, kb3 = jax.random.split(key, 7)

    # PhaseShifter: theta ~ U(0, 2*pi), shape (n_antenna, n_wide_beam)
    theta = jax.random.uniform(k_theta, (n_antenna, n_wide_beam),
                               minval=0.0, maxval=2.0 * np.pi, dtype=jnp.float32)
    scale = jnp.float32(np.sqrt(n_antenna))
    real_k = jnp.cos(theta) / scale
    imag_k = jnp.sin(theta) / scale
    # Block codebook [[R, -I], [I, R]], split by output half:
    #   real-output columns: [R; I]   imag-output columns: [-I; R]
    cb_real = jnp.concatenate([real_k, imag_k], axis=0)    # (2*n_antenna, n_wide)
    cb_imag = jnp.concatenate([-imag_k, real_k], axis=0)   # (2*n_antenna, n_wide)

    def linear(kw, kb, fan_in, fan_out):
        # nn.Linear-style uniform init, stored as (in, out) for x @ W.
        bound = 1.0 / np.sqrt(fan_in)
        w = jax.random.uniform(kw, (fan_in, fan_out), minval=-bound, maxval=bound,
                               dtype=jnp.float32)
        b = jax.random.uniform(kb, (1, fan_out), minval=-bound, maxval=bound,
                               dtype=jnp.float32)
        return w, b

    w1, b1 = linear(k1, kb1, n_wide_beam, 2 * n_wide_beam)
    w2, b2 = linear(k2, kb2, 2 * n_wide_beam, 3 * n_wide_beam)
    w3, b3 = linear(k3, kb3, 3 * n_wide_beam, n_narrow_beam)
    return cb_real, cb_imag, w1, b1, w2, b2, w3, b3


if __name__ == "__main__":
    # Small shapes consistent with the module.
    n_antenna_azimuth, n_antenna_elevation = 8, 4          # n_antenna = 32
    n_wide_beam_azimuth, n_wide_beam_elevation = 4, 2      # n_wide_beam = 8
    n_narrow_beam = 16
    batch = 8

    n_antenna = n_antenna_azimuth * n_antenna_elevation
    n_wide_beam = n_wide_beam_azimuth * n_wide_beam_elevation

    key = jax.random.PRNGKey(0)
    k_x, k_params = jax.random.split(key)

    x = jax.random.normal(k_x, (batch, 2 * n_antenna), dtype=jnp.float32)
    raw = build_params(k_params, n_antenna, n_wide_beam, n_narrow_beam)
    cb_real, cb_imag, w1, b1, w2, b2, w3, b3 = raw

    # Host float64 reference of the fused forward pass (removes any TPU matmul-
    # precision ambiguity from the comparison).
    xh = np.asarray(x, np.float64)
    cbr_h, cbi_h = np.asarray(cb_real, np.float64), np.asarray(cb_imag, np.float64)
    w1h, b1h = np.asarray(w1, np.float64), np.asarray(b1, np.float64)
    w2h, b2h = np.asarray(w2, np.float64), np.asarray(b2, np.float64)
    w3h, b3h = np.asarray(w3, np.float64), np.asarray(b3, np.float64)
    br, bi = xh @ cbr_h, xh @ cbi_h
    hh = np.maximum(br * br + bi * bi, 0.0)
    hh = np.maximum(hh @ w1h + b1h, 0.0)
    hh = np.maximum(hh @ w2h + b2h, 0.0)
    ref = hh @ w3h + b3h

    # f32 compute path: tight tolerance.
    params_f32 = prepare_params(*raw, compute_dtype=jnp.float32)
    out_f32 = beam_classifier_forward(x, params_f32)
    jax.block_until_ready(out_f32)
    np.testing.assert_allclose(np.asarray(out_f32), ref, rtol=1e-5, atol=1e-5)

    # bf16 compute path (default: bf16 MXU inputs, f32 accumulation): loose tolerance.
    params_bf16 = prepare_params(*raw)          # compute_dtype=jnp.bfloat16 (default)
    out_bf16 = beam_classifier_forward(x, params_bf16)
    jax.block_until_ready(out_bf16)
    np.testing.assert_allclose(np.asarray(out_bf16), ref, rtol=1e-1, atol=1e-1)

    print("KERNEL_OK")
</pallas_src>

<mosaic_0001>
module attributes {stable_mosaic.version = 11 : i64} {
  func.func @beam_classifier_kernel(%arg0: i32, %arg1: memref<8x64xf32, #tpu.memory_space<vmem>>, %arg2: memref<64x128xf32, #tpu.memory_space<vmem>>, %arg3: memref<128x128xf32, #tpu.memory_space<vmem>>, %arg4: memref<1x128xf32, #tpu.memory_space<vmem>>, %arg5: memref<128x128xf32, #tpu.memory_space<vmem>>, %arg6: memref<1x128xf32, #tpu.memory_space<vmem>>, %arg7: memref<128x16xf32, #tpu.memory_space<vmem>>, %arg8: memref<1x16xf32, #tpu.memory_space<vmem>>, %arg9: memref<8x16xf32, #tpu.memory_space<vmem>>) attributes {dimension_semantics = [#tpu.dimension_semantics<parallel>], iteration_bounds = array<i64: 1>, scalar_prefetch = 0 : i64, scratch_operands = 0 : i64, tpu.core_type = #tpu.core_type<tc>, window_params = [{transform_indices = @transform_0, window_bounds = array<i64: 8, 64>}, {pipeline_mode = #tpu.pipeline_mode<synchronous>, transform_indices = @transform_1, window_bounds = array<i64: 64, 128>}, {pipeline_mode = #tpu.pipeline_mode<synchronous>, transform_indices = @transform_2, window_bounds = array<i64: 128, 128>}, {pipeline_mode = #tpu.pipeline_mode<synchronous>, transform_indices = @transform_3, window_bounds = array<i64: 1, 128>}, {pipeline_mode = #tpu.pipeline_mode<synchronous>, transform_indices = @transform_4, window_bounds = array<i64: 128, 128>}, {pipeline_mode = #tpu.pipeline_mode<synchronous>, transform_indices = @transform_5, window_bounds = array<i64: 1, 128>}, {pipeline_mode = #tpu.pipeline_mode<synchronous>, transform_indices = @transform_6, window_bounds = array<i64: 128, 16>}, {pipeline_mode = #tpu.pipeline_mode<synchronous>, transform_indices = @transform_7, window_bounds = array<i64: 1, 16>}, {transform_indices = @transform_8, window_bounds = array<i64: 8, 16>}]} {
    %c0 = arith.constant 0 : index
    %c0_0 = arith.constant 0 : index
    %0 = vector.load %arg1[%c0, %c0_0] : memref<8x64xf32, #tpu.memory_space<vmem>>, vector<8x64xf32>
    %c0_1 = arith.constant 0 : index
    %c0_2 = arith.constant 0 : index
    %1 = vector.load %arg2[%c0_1, %c0_2] : memref<64x128xf32, #tpu.memory_space<vmem>>, vector<64x128xf32>
    %cst = arith.constant dense<0.000000e+00> : vector<8x128xf32>
    %2 = tpu.matmul %0, %1, %cst {dimension_numbers = #tpu.dot_dimension_numbers<[1], [0], [0], [1], [0, 0, 1, 1], [], []>} : vector<8x64xf32>, vector<64x128xf32>, vector<8x128xf32> -> vector<8x128xf32>
    %3 = arith.mulf %2, %2 : vector<8x128xf32>
    %c0_3 = arith.constant 0 : index
    %c0_4 = arith.constant 0 : index
    %4 = vector.load %arg3[%c0_3, %c0_4] : memref<128x128xf32, #tpu.memory_space<vmem>>, vector<128x128xf32>
    %cst_5 = arith.constant dense<0.000000e+00> : vector<8x128xf32>
    %5 = tpu.matmul %3, %4, %cst_5 {dimension_numbers = #tpu.dot_dimension_numbers<[1], [0], [0], [1], [0, 0, 1, 1], [], []>} : vector<8x128xf32>, vector<128x128xf32>, vector<8x128xf32> -> vector<8x128xf32>
    %c0_6 = arith.constant 0 : index
    %c0_7 = arith.constant 0 : index
    %6 = vector.load %arg4[%c0_6, %c0_7] : memref<1x128xf32, #tpu.memory_space<vmem>>, vector<1x128xf32>
    %7 = vector.broadcast %6 : vector<1x128xf32> to vector<8x128xf32>
    %8 = arith.addf %5, %7 : vector<8x128xf32>
    %cst_8 = arith.constant 0.000000e+00 : f32
    %9 = vector.broadcast %cst_8 : f32 to vector<8x128xf32>
    %10 = arith.maximumf %8, %9 : vector<8x128xf32>
    %c0_9 = arith.constant 0 : index
    %c0_10 = arith.constant 0 : index
    %11 = vector.load %arg5[%c0_9, %c0_10] : memref<128x128xf32, #tpu.memory_space<vmem>>, vector<128x128xf32>
    %cst_11 = arith.constant dense<0.000000e+00> : vector<8x128xf32>
    %12 = tpu.matmul %10, %11, %cst_11 {dimension_numbers = #tpu.dot_dimension_numbers<[1], [0], [0], [1], [0, 0, 1, 1], [], []>} : vector<8x128xf32>, vector<128x128xf32>, vector<8x128xf32> -> vector<8x128xf32>
    %c0_12 = arith.constant 0 : index
    %c0_13 = arith.constant 0 : index
    %13 = vector.load %arg6[%c0_12, %c0_13] : memref<1x128xf32, #tpu.memory_space<vmem>>, vector<1x128xf32>
    %14 = vector.broadcast %13 : vector<1x128xf32> to vector<8x128xf32>
    %15 = arith.addf %12, %14 : vector<8x128xf32>
    %cst_14 = arith.constant 0.000000e+00 : f32
    %16 = vector.broadcast %cst_14 : f32 to vector<8x128xf32>
    %17 = arith.maximumf %15, %16 : vector<8x128xf32>
    %c0_15 = arith.constant 0 : index
    %c0_16 = arith.constant 0 : index
    %18 = vector.load %arg7[%c0_15, %c0_16] : memref<128x16xf32, #tpu.memory_space<vmem>>, vector<128x16xf32>
    %cst_17 = arith.constant dense<0.000000e+00> : vector<8x16xf32>
    %19 = tpu.matmul %17, %18, %cst_17 {dimension_numbers = #tpu.dot_dimension_numbers<[1], [0], [0], [1], [0, 0, 1, 1], [], []>} : vector<8x128xf32>, vector<128x16xf32>, vector<8x16xf32> -> vector<8x16xf32>
    %c0_18 = arith.constant 0 : index
    %c0_19 = arith.constant 0 : index
    %20 = vector.load %arg8[%c0_18, %c0_19] : memref<1x16xf32, #tpu.memory_space<vmem>>, vector<1x16xf32>
    %21 = vector.broadcast %20 : vector<1x16xf32> to vector<8x16xf32>
    %22 = arith.addf %19, %21 : vector<8x16xf32>
    %c0_20 = arith.constant 0 : index
    %c0_21 = arith.constant 0 : index
    %23 = vector.load %arg9[%c0_20, %c0_21] : memref<8x16xf32, #tpu.memory_space<vmem>>, vector<8x16xf32>
    tpu.vector_store %arg9[%c0_20, %c0_21], %22 {strides = array<i32>} : memref<8x16xf32, #tpu.memory_space<vmem>>, vector<8x16xf32>,
    return
  }
  func.func @transform_0(%arg0: i32) -> (i32, i32) {
    %c0_i32 = arith.constant 0 : i32
    %c0_i32_0 = arith.constant 0 : i32
    return %arg0, %c0_i32 : i32, i32
  }
  func.func @transform_1(%arg0: i32) -> (i32, i32) {
    %c0_i32 = arith.constant 0 : i32
    %c0_i32_0 = arith.constant 0 : i32
    %c0_i32_1 = arith.constant 0 : i32
    return %c0_i32, %c0_i32_0 : i32, i32
  }
  func.func @transform_2(%arg0: i32) -> (i32, i32) {
    %c0_i32 = arith.constant 0 : i32
    %c0_i32_0 = arith.constant 0 : i32
    %c0_i32_1 = arith.constant 0 : i32
    return %c0_i32, %c0_i32_0 : i32, i32
  }
  func.func @transform_3(%arg0: i32) -> (i32, i32) {
    %c0_i32 = arith.constant 0 : i32
    %c0_i32_0 = arith.constant 0 : i32
    %c0_i32_1 = arith.constant 0 : i32
    return %c0_i32, %c0_i32_0 : i32, i32
  }
  func.func @transform_4(%arg0: i32) -> (i32, i32) {
    %c0_i32 = arith.constant 0 : i32
    %c0_i32_0 = arith.constant 0 : i32
    %c0_i32_1 = arith.constant 0 : i32
    return %c0_i32, %c0_i32_0 : i32, i32
  }
  func.func @transform_5(%arg0: i32) -> (i32, i32) {
    %c0_i32 = arith.constant 0 : i32
    %c0_i32_0 = arith.constant 0 : i32
    %c0_i32_1 = arith.constant 0 : i32
    return %c0_i32, %c0_i32_0 : i32, i32
  }
  func.func @transform_6(%arg0: i32) -> (i32, i32) {
    %c0_i32 = arith.constant 0 : i32
    %c0_i32_0 = arith.constant 0 : i32
    %c0_i32_1 = arith.constant 0 : i32
    return %c0_i32, %c0_i32_0 : i32, i32
  }
  func.func @transform_7(%arg0: i32) -> (i32, i32) {
    %c0_i32 = arith.constant 0 : i32
    %c0_i32_0 = arith.constant 0 : i32
    %c0_i32_1 = arith.constant 0 : i32
    return %c0_i32, %c0_i32_0 : i32, i32
  }
  func.func @transform_8(%arg0: i32) -> (i32, i32) {
    %c0_i32 = arith.constant 0 : i32
    %c0_i32_0 = arith.constant 0 : i32
    return %arg0, %c0_i32 : i32, i32
  }
}

</mosaic_0001>

<llo_original>
// kernel: tpu_custom_call.1
$region0: #{tpu_custom_call.1}
  #allocation0 [shape = 'u32[]', space=smem, size = 0x4, offset = 0x4, fixed_abs, tag = 'smem constant byte address 0x4 - core index']
  #allocation1 [shape = 'u32[144,128]{1,0:T(1,128)}', space=vmem, size = 0x12000, scoped, tag = 'internal scratch']
  %s0 = inlined_call_operand.vmem [shape: f32[8,64], index: 0, kind: input, shape index: {}]
  %s1 = inlined_call_operand.hbm [shape: f32[64,128], index: 1, kind: input, shape index: {}]
  %s2 = inlined_call_operand.vmem [shape: f32[128,128], index: 2, kind: input, shape index: {}]
  %s3 = inlined_call_operand.vmem [shape: f32[1,128], index: 3, kind: input, shape index: {}]
  %s4 = inlined_call_operand.hbm [shape: f32[128,128], index: 4, kind: input, shape index: {}]
  %s5 = inlined_call_operand.vmem [shape: f32[1,128], index: 5, kind: input, shape index: {}]
  %s6 = inlined_call_operand.vmem [shape: f32[128,16], index: 6, kind: input, shape index: {}]
  %s7 = inlined_call_operand.vmem [shape: f32[1,16], index: 7, kind: input, shape index: {}]
  %s8 = inlined_call_operand.hbm [shape: f32[8,16], index: 8, kind: output, shape index: {}]
  %s9 = sld [smem:[#allocation0]]
  $region50: #{tpu_custom_call.1} parent=0
    _
  %s11 = ssub.s32 1, %s9
  %s12 = scalar_select 0, %s11, %s9
  $region1: #{tpu_custom_call.1} parent=0
    #allocation2 [shape = 'u8[32768]{0}', space=vmem, size = 0x8000, scoped, tag = 'input window, operand 1, single buffered']
    #allocation3 [shape = 's32[1]{0}', space=sflag, size = 0x4, scoped, tag = 'scoped memory for tpu_custom_call.1']
    #allocation4 [shape = 's32[1]{0}', space=sflag, size = 0x4, scoped, tag = 'scoped memory for tpu_custom_call.1']
    #allocation5 [shape = 'u8[65536]{0}', space=vmem, size = 0x10000, scoped, tag = 'input window, operand 4, single buffered']
    #allocation6 [shape = 's32[1]{0}', space=sflag, size = 0x4, scoped, tag = 'scoped memory for tpu_custom_call.1']
    #allocation7 [shape = 'u8[4096]{0}', space=vmem, size = 0x1000, scoped, tag = 'output window, operand 0, single buffered']
    %13 = vsyncpa [#allocation3], 0
    %14 = vsyncpa [#allocation6], 0
    %15 = vsyncpa [#allocation4], 0
    // Predicated region
    $region2: #{tpu_custom_call.1} parent=1 // pred_check
      _
    $region3: #{tpu_custom_call.1} parent=1 // pred_check_branch
      %17 = sbr.rel (0) target = $region5
    $region4: #{tpu_custom_call.1} parent=1 // pred_region
      _
    $region5: #{tpu_custom_call.1} parent=1 // pred_fallthru
      _
    // Predicated region
    $region6: #{tpu_custom_call.1} parent=1 // pred_check
      _
    $region7: #{tpu_custom_call.1} parent=1 // pred_check_branch
      %19 = sbr.rel (0) target = $region9
    $region8: #{tpu_custom_call.1} parent=1 // pred_region
      %s21 = ssub.s32 1024, 1024
      %22 = vsyncadd [#allocation3], %s21
      %s23 = sshll.u32 [#allocation2], 4
      %s24 = int_to_ptr.vmem [resolvable:$true] %s23
      %29 = dma.hbm_to_vmem [thread:$0]  %s1, 1024, %s24, [#allocation3], 128, 128, 8
    $region9: #{tpu_custom_call.1} parent=1 // pred_fallthru
      _
    // Predicated region
    $region10: #{tpu_custom_call.1} parent=1 // pred_check
      _
    $region11: #{tpu_custom_call.1} parent=1 // pred_check_branch
      %31 = sbr.rel (0) target = $region13
    $region12: #{tpu_custom_call.1} parent=1 // pred_region
      _
    $region13: #{tpu_custom_call.1} parent=1 // pred_fallthru
      _
    // Predicated region
    $region14: #{tpu_custom_call.1} parent=1 // pred_check
      _
    $region15: #{tpu_custom_call.1} parent=1 // pred_check_branch
      %33 = sbr.rel (0) target = $region17
    $region16: #{tpu_custom_call.1} parent=1 // pred_region
      _
    $region17: #{tpu_custom_call.1} parent=1 // pred_fallthru
      _
    // Predicated region
    $region18: #{tpu_custom_call.1} parent=1 // pred_check
      _
    $region19: #{tpu_custom_call.1} parent=1 // pred_check_branch
      %35 = sbr.rel (0) target = $region21
    $region20: #{tpu_custom_call.1} parent=1 // pred_region
      %s37 = ssub.s32 2048, 2048
      %38 = vsyncadd [#allocation6], %s37
      %s39 = sshll.u32 [#allocation5], 4
      %s40 = int_to_ptr.vmem [resolvable:$true] %s39
      %45 = dma.hbm_to_vmem [thread:$0]  %s4, 2048, %s40, [#allocation6], 128, 128, 8
    $region21: #{tpu_custom_call.1} parent=1 // pred_fallthru
      _
    // Predicated region
    $region22: #{tpu_custom_call.1} parent=1 // pred_check
      _
    $region23: #{tpu_custom_call.1} parent=1 // pred_check_branch
      %47 = sbr.rel (0) target = $region25
    $region24: #{tpu_custom_call.1} parent=1 // pred_region
      _
    $region25: #{tpu_custom_call.1} parent=1 // pred_fallthru
      _
    // Predicated region
    $region26: #{tpu_custom_call.1} parent=1 // pred_check
      _
    $region27: #{tpu_custom_call.1} parent=1 // pred_check_branch
      %49 = sbr.rel (0) target = $region29
    $region28: #{tpu_custom_call.1} parent=1 // pred_region
      _
    $region29: #{tpu_custom_call.1} parent=1 // pred_fallthru
      _
    // Predicated region
    $region30: #{tpu_custom_call.1} parent=1 // pred_check
      _
    $region31: #{tpu_custom_call.1} parent=1 // pred_check_branch
      %51 = sbr.rel (0) target = $region33
    $region32: #{tpu_custom_call.1} parent=1 // pred_region
      _
    $region33: #{tpu_custom_call.1} parent=1 // pred_fallthru
      _
    // Predicated region
    $region34: #{tpu_custom_call.1} parent=1 // pred_check
      _
    $region35: #{tpu_custom_call.1} parent=1 // pred_check_branch
      %53 = sbr.rel (0) target = $region37
    $region36: #{tpu_custom_call.1} parent=1 // pred_region
      %54 = dma.done [#allocation3], 1024
    $region37: #{tpu_custom_call.1} parent=1 // pred_fallthru
      _
    // Predicated region
    $region38: #{tpu_custom_call.1} parent=1 // pred_check
      _
    $region39: #{tpu_custom_call.1} parent=1 // pred_check_branch
      %56 = sbr.rel (0) target = $region41
    $region40: #{tpu_custom_call.1} parent=1 // pred_region
      %57 = dma.done [#allocation6], 2048
    $region41: #{tpu_custom_call.1} parent=1 // pred_fallthru
      _
    %v58 = vld [vmem:[%s0] sm:$0xff]
    %v59 = vld [vmem:[#allocation2] sm:$0xff]
    %v60 = vld [vmem:[#allocation2 + $0x8] sm:$0xff]
    %v61 = vld [vmem:[#allocation2 + $0x10] sm:$0xff]
    %v62 = vld [vmem:[#allocation2 + $0x18] sm:$0xff]
    %v63 = vld [vmem:[#allocation2 + $0x20] sm:$0xff]
    %v64 = vld [vmem:[#allocation2 + $0x28] sm:$0xff]
    %v65 = vld [vmem:[#allocation2 + $0x30] sm:$0xff]
    %v66 = vld [vmem:[#allocation2 + $0x38] sm:$0xff]
    %vm67 = vcmask 523264
    %v69 = vsel %vm67, %v58, 0
    %71 = vmatprep.subr.mxu0 0.0
    %72 = vmatpush1.msra.mxu0 %v59
    %73 = vmatprep.subr.mxu0 0.0
    %74 = vmatpush1.msra.mxu0 %v60
    %75 = vmatprep.subr.mxu0 0.0
    %76 = vmatpush1.msra.mxu0 %v61
    %77 = vmatprep.subr.mxu0 0.0
    %78 = vmatpush1.msra.mxu0 %v62
    %79 = vmatprep.subr.mxu0 0.0
    %80 = vmatpush1.msra.mxu0 %v63
    %81 = vmatprep.subr.mxu0 0.0
    %82 = vmatpush1.msra.mxu0 %v64
    %83 = vmatprep.subr.mxu0 0.0
    %84 = vmatpush1.msra.mxu0 %v65
    %85 = vmatprep.subr.mxu0 0.0
    %86 = vmatpush1.msra.mxu0 %v66
    %87 = vmatprep.subr.mxu0 0.0
    %88 = vmatpush1.msra.mxu0 0.0
    %89 = vmatprep.subr.mxu0 0.0
    %90 = vmatpush1.msra.mxu0 0.0
    %91 = vmatprep.subr.mxu0 0.0
    %92 = vmatpush1.msra.mxu0 0.0
    %93 = vmatprep.subr.mxu0 0.0
    %94 = vmatpush1.msra.mxu0 0.0
    %95 = vmatprep.subr.mxu0 0.0
    %96 = vmatpush1.msra.mxu0 0.0
    %97 = vmatprep.subr.mxu0 0.0
    %98 = vmatpush1.msra.mxu0 0.0
    %99 = vmatprep.subr.mxu0 0.0
    %100 = vmatpush1.msra.mxu0 0.0
    %101 = vmatprep.subr.mxu0 0.0
    %102 = vmatpush1.msra.mxu0 0.0
    %103 = vmatprep.subr.mxu0 0.0
    %104 = vmatpush1.msra.mxu0 0.0
    %105 = vmatprep.subr.mxu0 0.0
    %106 = vmatpush1.msra.mxu0 0.0
    %107 = vmatprep.subr.mxu0 0.0
    %108 = vmatpush1.msra.mxu0 0.0
    %109 = vmatprep.subr.mxu0 0.0
    %110 = vmatpush1.msra.mxu0 0.0
    %111 = vmatprep.subr.mxu0 0.0
    %112 = vmatpush1.msra.mxu0 0.0
    %113 = vmatprep.subr.mxu0 0.0
    %114 = vmatpush1.msra.mxu0 0.0
    %115 = vmatprep.subr.mxu0 0.0
    %116 = vmatpush1.msra.mxu0 0.0
    %117 = vmatprep.subr.mxu0 0.0
    %118 = vmatpush1.msra.mxu0 0.0
    %119 = vmatprep.subr.mxu0 0.0
    %120 = vmatpush1.msra.mxu0 0.0
    %121 = vmatprep.subr.mxu0 0.0
    %122 = vmatpush1.msra.mxu0 0.0
    %123 = vmatprep.subr.mxu0 0.0
    %124 = vmatpush1.msra.mxu0 0.0
    %125 = vmatprep.subr.mxu0 0.0
    %126 = vmatpush1.msra.mxu0 0.0
    %127 = vmatprep.subr.mxu0 0.0
    %128 = vmatpush1.msra.mxu0 0.0
    %129 = vmatprep.subr.mxu0 0.0
    %130 = vmatpush1.msra.mxu0 0.0
    %131 = vmatprep.subr.mxu0 0.0
    %132 = vmatpush1.msra.mxu0 0.0
    %133 = vmatprep.subr.mxu0 0.0
    %134 = vmatpush1.msra.mxu0 0.0
    %135 = vmatprep.mubr.f32.mxu0 0.0
    %136 = vmatmul.mubr.f32.gmra.mrb[0].mxu0 %v69
    %v137 = vpop.f32.mrb[0].mxu0
    %v138 = vadd.f32 0.0, %v137
    %v139 = vpop.f32.mrb[0].mxu0
    %140 = vdwg.mxu0
    %v141 = vmul.f32 %v138, %v138
    %v142 = vld [vmem:[%s2] sm:$0xff]
    %v143 = vld [vmem:[%s2 + $0x8] sm:$0xff]
    %v144 = vld [vmem:[%s2 + $0x10] sm:$0xff]
    %v145 = vld [vmem:[%s2 + $0x18] sm:$0xff]
    %v146 = vld [vmem:[%s2 + $0x20] sm:$0xff]
    %v147 = vld [vmem:[%s2 + $0x28] sm:$0xff]
    %v148 = vld [vmem:[%s2 + $0x30] sm:$0xff]
    %v149 = vld [vmem:[%s2 + $0x38] sm:$0xff]
    %v150 = vld [vmem:[%s2 + $0x40] sm:$0xff]
    %v151 = vld [vmem:[%s2 + $0x48] sm:$0xff]
    %v152 = vld [vmem:[%s2 + $0x50] sm:$0xff]
    %v153 = vld [vmem:[%s2 + $0x58] sm:$0xff]
    %v154 = vld [vmem:[%s2 + $0x60] sm:$0xff]
    %v155 = vld [vmem:[%s2 + $0x68] sm:$0xff]
    %v156 = vld [vmem:[%s2 + $0x70] sm:$0xff]
    %v157 = vld [vmem:[%s2 + $0x78] sm:$0xff]
    %v158 = vld [vmem:[%s3] sm:$0x1]
    %v160 = vlaneseq
    %v161 = vshrl.u32 %v160, 7
    %v162 = vsub.s32 0, %v161
    %v163 = vrot.slane %v158, %v162
    %165 = vmatprep.subr.mxu0 0.0
    %166 = vmatpush1.msra.mxu0 %v142
    %167 = vmatprep.subr.mxu0 0.0
    %168 = vmatpush1.msra.mxu0 %v143
    %169 = vmatprep.subr.mxu0 0.0
    %170 = vmatpush1.msra.mxu0 %v144
    %171 = vmatprep.subr.mxu0 0.0
    %172 = vmatpush1.msra.mxu0 %v145
    %173 = vmatprep.subr.mxu0 0.0
    %174 = vmatpush1.msra.mxu0 %v146
    %175 = vmatprep.subr.mxu0 0.0
    %176 = vmatpush1.msra.mxu0 %v147
    %177 = vmatprep.subr.mxu0 0.0
    %178 = vmatpush1.msra.mxu0 %v148
    %179 = vmatprep.subr.mxu0 0.0
    %180 = vmatpush1.msra.mxu0 %v149
    %181 = vmatprep.subr.mxu0 0.0
    %182 = vmatpush1.msra.mxu0 %v150
    %183 = vmatprep.subr.mxu0 0.0
    %184 = vmatpush1.msra.mxu0 %v151
    %185 = vmatprep.subr.mxu0 0.0
    %186 = vmatpush1.msra.mxu0 %v152
    %187 = vmatprep.subr.mxu0 0.0
    %188 = vmatpush1.msra.mxu0 %v153
    %189 = vmatprep.subr.mxu0 0.0
    %190 = vmatpush1.msra.mxu0 %v154
    %191 = vmatprep.subr.mxu0 0.0
    %192 = vmatpush1.msra.mxu0 %v155
    %193 = vmatprep.subr.mxu0 0.0
    %194 = vmatpush1.msra.mxu0 %v156
    %195 = vmatprep.subr.mxu0 0.0
    %196 = vmatpush1.msra.mxu0 %v157
    %197 = vmatprep.subr.mxu0 0.0
    %198 = vmatpush1.msra.mxu0 0.0
    %199 = vmatprep.subr.mxu0 0.0
    %200 = vmatpush1.msra.mxu0 0.0
    %201 = vmatprep.subr.mxu0 0.0
    %202 = vmatpush1.msra.mxu0 0.0
    %203 = vmatprep.subr.mxu0 0.0
    %204 = vmatpush1.msra.mxu0 0.0
    %205 = vmatprep.subr.mxu0 0.0
    %206 = vmatpush1.msra.mxu0 0.0
    %207 = vmatprep.subr.mxu0 0.0
    %208 = vmatpush1.msra.mxu0 0.0
    %209 = vmatprep.subr.mxu0 0.0
    %210 = vmatpush1.msra.mxu0 0.0
    %211 = vmatprep.subr.mxu0 0.0
    %212 = vmatpush1.msra.mxu0 0.0
    %213 = vmatprep.subr.mxu0 0.0
    %214 = vmatpush1.msra.mxu0 0.0
    %215 = vmatprep.subr.mxu0 0.0
    %216 = vmatpush1.msra.mxu0 0.0
    %217 = vmatprep.subr.mxu0 0.0
    %218 = vmatpush1.msra.mxu0 0.0
    %219 = vmatprep.subr.mxu0 0.0
    %220 = vmatpush1.msra.mxu0 0.0
    %221 = vmatprep.subr.mxu0 0.0
    %222 = vmatpush1.msra.mxu0 0.0
    %223 = vmatprep.subr.mxu0 0.0
    %224 = vmatpush1.msra.mxu0 0.0
    %225 = vmatprep.subr.mxu0 0.0
    %226 = vmatpush1.msra.mxu0 0.0
    %227 = vmatprep.subr.mxu0 0.0
    %228 = vmatpush1.msra.mxu0 0.0
    %229 = vmatprep.mubr.f32.mxu0 0.0
    %230 = vmatmul.mubr.f32.gmra.mrb[0].mxu0 %v141
    %v231 = vpop.f32.mrb[0].mxu0
    %v232 = vadd.f32 %v163, %v231
    %v233 = vpop.f32.mrb[0].mxu0
    %234 = vdwg.mxu0
    %v235 = vmax.f32 %v232, 0.0
    %v236 = vld [vmem:[#allocation5] sm:$0xff]
    %v237 = vld [vmem:[#allocation5 + $0x8] sm:$0xff]
    %v238 = vld [vmem:[#allocation5 + $0x10] sm:$0xff]
    %v239 = vld [vmem:[#allocation5 + $0x18] sm:$0xff]
    %v240 = vld [vmem:[#allocation5 + $0x20] sm:$0xff]
    %v241 = vld [vmem:[#allocation5 + $0x28] sm:$0xff]
    %v242 = vld [vmem:[#allocation5 + $0x30] sm:$0xff]
    %v243 = vld [vmem:[#allocation5 + $0x38] sm:$0xff]
    %v244 = vld [vmem:[#allocation5 + $0x40] sm:$0xff]
    %v245 = vld [vmem:[#allocation5 + $0x48] sm:$0xff]
    %v246 = vld [vmem:[#allocation5 + $0x50] sm:$0xff]
    %v247 = vld [vmem:[#allocation5 + $0x58] sm:$0xff]
    %v248 = vld [vmem:[#allocation5 + $0x60] sm:$0xff]
    %v249 = vld [vmem:[#allocation5 + $0x68] sm:$0xff]
    %v250 = vld [vmem:[#allocation5 + $0x70] sm:$0xff]
    %v251 = vld [vmem:[#allocation5 + $0x78] sm:$0xff]
    %v252 = vld [vmem:[%s5] sm:$0x1]
    %v254 = vlaneseq
    %v255 = vshrl.u32 %v254, 7
    %v256 = vsub.s32 0, %v255
    %v257 = vrot.slane %v252, %v256
    %259 = vmatprep.subr.mxu0 0.0
    %260 = vmatpush1.msra.mxu0 %v236
    %261 = vmatprep.subr.mxu0 0.0
    %262 = vmatpush1.msra.mxu0 %v237
    %263 = vmatprep.subr.mxu0 0.0
    %264 = vmatpush1.msra.mxu0 %v238
    %265 = vmatprep.subr.mxu0 0.0
    %266 = vmatpush1.msra.mxu0 %v239
    %267 = vmatprep.subr.mxu0 0.0
    %268 = vmatpush1.msra.mxu0 %v240
    %269 = vmatprep.subr.mxu0 0.0
    %270 = vmatpush1.msra.mxu0 %v241
    %271 = vmatprep.subr.mxu0 0.0
    %272 = vmatpush1.msra.mxu0 %v242
    %273 = vmatprep.subr.mxu0 0.0
    %274 = vmatpush1.msra.mxu0 %v243
    %275 = vmatprep.subr.mxu0 0.0
    %276 = vmatpush1.msra.mxu0 %v244
    %277 = vmatprep.subr.mxu0 0.0
    %278 = vmatpush1.msra.mxu0 %v245
    %279 = vmatprep.subr.mxu0 0.0
    %280 = vmatpush1.msra.mxu0 %v246
    %281 = vmatprep.subr.mxu0 0.0
    %282 = vmatpush1.msra.mxu0 %v247
    %283 = vmatprep.subr.mxu0 0.0
    %284 = vmatpush1.msra.mxu0 %v248
    %285 = vmatprep.subr.mxu0 0.0
    %286 = vmatpush1.msra.mxu0 %v249
    %287 = vmatprep.subr.mxu0 0.0
    %288 = vmatpush1.msra.mxu0 %v250
    %289 = vmatprep.subr.mxu0 0.0
    %290 = vmatpush1.msra.mxu0 %v251
    %291 = vmatprep.subr.mxu0 0.0
    %292 = vmatpush1.msra.mxu0 0.0
    %293 = vmatprep.subr.mxu0 0.0
    %294 = vmatpush1.msra.mxu0 0.0
    %295 = vmatprep.subr.mxu0 0.0
    %296 = vmatpush1.msra.mxu0 0.0
    %297 = vmatprep.subr.mxu0 0.0
    %298 = vmatpush1.msra.mxu0 0.0
    %299 = vmatprep.subr.mxu0 0.0
    %300 = vmatpush1.msra.mxu0 0.0
    %301 = vmatprep.subr.mxu0 0.0
    %302 = vmatpush1.msra.mxu0 0.0
    %303 = vmatprep.subr.mxu0 0.0
    %304 = vmatpush1.msra.mxu0 0.0
    %305 = vmatprep.subr.mxu0 0.0
    %306 = vmatpush1.msra.mxu0 0.0
    %307 = vmatprep.subr.mxu0 0.0
    %308 = vmatpush1.msra.mxu0 0.0
    %309 = vmatprep.subr.mxu0 0.0
    %310 = vmatpush1.msra.mxu0 0.0
    %311 = vmatprep.subr.mxu0 0.0
    %312 = vmatpush1.msra.mxu0 0.0
    %313 = vmatprep.subr.mxu0 0.0
    %314 = vmatpush1.msra.mxu0 0.0
    %315 = vmatprep.subr.mxu0 0.0
    %316 = vmatpush1.msra.mxu0 0.0
    %317 = vmatprep.subr.mxu0 0.0
    %318 = vmatpush1.msra.mxu0 0.0
    %319 = vmatprep.subr.mxu0 0.0
    %320 = vmatpush1.msra.mxu0 0.0
    %321 = vmatprep.subr.mxu0 0.0
    %322 = vmatpush1.msra.mxu0 0.0
    %323 = vmatprep.mubr.f32.mxu0 0.0
    %324 = vmatmul.mubr.f32.gmra.mrb[0].mxu0 %v235
    %v325 = vpop.f32.mrb[0].mxu0
    %v326 = vadd.f32 %v257, %v325
    %v327 = vpop.f32.mrb[0].mxu0
    %328 = vdwg.mxu0
    %v329 = vmax.f32 %v326, 0.0
    %v330 = vld [vmem:[%s6] sm:$0xff]
    %v331 = vld [vmem:[%s6 + $0x8] sm:$0xff]
    %v332 = vld [vmem:[%s6 + $0x10] sm:$0xff]
    %v333 = vld [vmem:[%s6 + $0x18] sm:$0xff]
    %v334 = vld [vmem:[%s6 + $0x20] sm:$0xff]
    %v335 = vld [vmem:[%s6 + $0x28] sm:$0xff]
    %v336 = vld [vmem:[%s6 + $0x30] sm:$0xff]
    %v337 = vld [vmem:[%s6 + $0x38] sm:$0xff]
    %v338 = vld [vmem:[%s6 + $0x40] sm:$0xff]
    %v339 = vld [vmem:[%s6 + $0x48] sm:$0xff]
    %v340 = vld [vmem:[%s6 + $0x50] sm:$0xff]
    %v341 = vld [vmem:[%s6 + $0x58] sm:$0xff]
    %v342 = vld [vmem:[%s6 + $0x60] sm:$0xff]
    %v343 = vld [vmem:[%s6 + $0x68] sm:$0xff]
    %v344 = vld [vmem:[%s6 + $0x70] sm:$0xff]
    %v345 = vld [vmem:[%s6 + $0x78] sm:$0xff]
    %v346 = vld [vmem:[%s7] sm:$0x1]
    %v348 = vlaneseq
    %v349 = vshrl.u32 %v348, 7
    %v350 = vsub.s32 0, %v349
    %v351 = vrot.slane %v346, %v350
    %353 = vmatprep.subr.mxu0 0.0
    %354 = vmatpush1.msra.mxu0 %v330
    %355 = vmatprep.subr.mxu0 0.0
    %356 = vmatpush1.msra.mxu0 %v331
    %357 = vmatprep.subr.mxu0 0.0
    %358 = vmatpush1.msra.mxu0 %v332
    %359 = vmatprep.subr.mxu0 0.0
    %360 = vmatpush1.msra.mxu0 %v333
    %361 = vmatprep.subr.mxu0 0.0
    %362 = vmatpush1.msra.mxu0 %v334
    %363 = vmatprep.subr.mxu0 0.0
    %364 = vmatpush1.msra.mxu0 %v335
    %365 = vmatprep.subr.mxu0 0.0
    %366 = vmatpush1.msra.mxu0 %v336
    %367 = vmatprep.subr.mxu0 0.0
    %368 = vmatpush1.msra.mxu0 %v337
    %369 = vmatprep.subr.mxu0 0.0
    %370 = vmatpush1.msra.mxu0 %v338
    %371 = vmatprep.subr.mxu0 0.0
    %372 = vmatpush1.msra.mxu0 %v339
    %373 = vmatprep.subr.mxu0 0.0
    %374 = vmatpush1.msra.mxu0 %v340
    %375 = vmatprep.subr.mxu0 0.0
    %376 = vmatpush1.msra.mxu0 %v341
    %377 = vmatprep.subr.mxu0 0.0
    %378 = vmatpush1.msra.mxu0 %v342
    %379 = vmatprep.subr.mxu0 0.0
    %380 = vmatpush1.msra.mxu0 %v343
    %381 = vmatprep.subr.mxu0 0.0
    %382 = vmatpush1.msra.mxu0 %v344
    %383 = vmatprep.subr.mxu0 0.0
    %384 = vmatpush1.msra.mxu0 %v345
    %385 = vmatprep.subr.mxu0 0.0
    %386 = vmatpush1.msra.mxu0 0.0
    %387 = vmatprep.subr.mxu0 0.0
    %388 = vmatpush1.msra.mxu0 0.0
    %389 = vmatprep.subr.mxu0 0.0
    %390 = vmatpush1.msra.mxu0 0.0
    %391 = vmatprep.subr.mxu0 0.0
    %392 = vmatpush1.msra.mxu0 0.0
    %393 = vmatprep.subr.mxu0 0.0
    %394 = vmatpush1.msra.mxu0 0.0
    %395 = vmatprep.subr.mxu0 0.0
    %396 = vmatpush1.msra.mxu0 0.0
    %397 = vmatprep.subr.mxu0 0.0
    %398 = vmatpush1.msra.mxu0 0.0
    %399 = vmatprep.subr.mxu0 0.0
    %400 = vmatpush1.msra.mxu0 0.0
    %401 = vmatprep.subr.mxu0 0.0
    %402 = vmatpush1.msra.mxu0 0.0
    %403 = vmatprep.subr.mxu0 0.0
    %404 = vmatpush1.msra.mxu0 0.0
    %405 = vmatprep.subr.mxu0 0.0
    %406 = vmatpush1.msra.mxu0 0.0
    %407 = vmatprep.subr.mxu0 0.0
    %408 = vmatpush1.msra.mxu0 0.0
    %409 = vmatprep.subr.mxu0 0.0
    %410 = vmatpush1.msra.mxu0 0.0
    %411 = vmatprep.subr.mxu0 0.0
    %412 = vmatpush1.msra.mxu0 0.0
    %413 = vmatprep.subr.mxu0 0.0
    %414 = vmatpush1.msra.mxu0 0.0
    %415 = vmatprep.subr.mxu0 0.0
    %416 = vmatpush1.msra.mxu0 0.0
    %417 = vmatprep.mubr.f32.mxu0 0.0
    %418 = vmatmul.mubr.f32.gmra.mrb[0].mxu0 %v329
    %v419 = vpop.f32.mrb[0].mxu0
    %v420 = vadd.f32 %v351, %v419
    %v421 = vpop.f32.mrb[0].mxu0
    %422 = vdwg.mxu0
    %vm423 = vcmask 130048
    %424 = vst.msk [vmem:[#allocation7] sm:$0xff] %vm423, %v420
    // Predicated region
    $region42: #{tpu_custom_call.1} parent=1 // pred_check
      _
    $region43: #{tpu_custom_call.1} parent=1 // pred_check_branch
      %426 = sbr.rel (0) target = $region45
    $region44: #{tpu_custom_call.1} parent=1 // pred_region
      %s428 = ssub.s32 128, 128
      %429 = vsyncadd [#allocation4], %s428
      %s431 = sshll.u32 [#allocation7], 4
      %s432 = int_to_ptr.vmem [resolvable:$true] %s431
      %434 = dma.vmem_to_hbm [thread:$0]  %s432, 128, %s8, [#allocation4]
    $region45: #{tpu_custom_call.1} parent=1 // pred_fallthru
      _
    // Predicated region
    $region46: #{tpu_custom_call.1} parent=1 // pred_check
      _
    $region47: #{tpu_custom_call.1} parent=1 // pred_check_branch
      %436 = sbr.rel (0) target = $region49
    $region48: #{tpu_custom_call.1} parent=1 // pred_region
      %437 = dma.done [#allocation4], 128
    $region49: #{tpu_custom_call.1} parent=1 // pred_fallthru
      _
    %438 = vsyncpa [#allocation3], 1
    %439 = vsyncpa [#allocation6], 1
    %440 = vsyncpa [#allocation4], 1

</llo_original>
